<compile_context>
chip_gen: v5e
topology: v5e:2x2
jax: 0.10.0
libtpu: 0.0.40
codegen_flags: <defaults>
</compile_context>

<pallas_src>
import jax
import jax.numpy as jnp
from jax.experimental import pallas as pl
from jax.experimental.pallas import tpu as pltpu

_NCORES = 2  # megacore split of the batch reduction (v7x); extra grid points are cheap on 1-TC chips


def _round_up(a, b):
    return ((a + b - 1) // b) * b


def _nc1_kernel(x_ref, labels_ref, mnt_ref, out_ref):
    i = pl.program_id(1)

    @pl.when(i == 0)
    def _():
        out_ref[...] = jnp.zeros_like(out_ref)

    x = x_ref[...].astype(jnp.float32)          # (TB, D)
    labels = labels_ref[...]                    # (TB, 1) int32

    # Row-wise L2 normalization of x (matches torch .norm(dim=1, keepdim=True) + 1e-10).
    ss = jnp.sum(x * x, axis=1, keepdims=True)
    inv = pl.reciprocal(jnp.sqrt(ss) + 1e-10, approx=False)
    x_n = x * inv

    # Means are pre-normalized and pre-transposed in the wrapper: mnt is (D, Cp).
    cos = jnp.dot(x_n, mnt_ref[...], preferred_element_type=jnp.float32)  # (TB, Cp)

    # Per-row one-hot class gate (padded rows have label -1 -> never match).
    cls = jax.lax.broadcasted_iota(jnp.int32, cos.shape, 1)
    contrib = jnp.where(labels == cls, 1.0 - cos, 0.0)        # (TB, Cp)

    # Reduce the batch tile to an (8, Cp) sublane-aligned partial: reshape splits
    # along the sublane grouping (no tile-boundary crossing), then VALU-only adds.
    tb, cp = contrib.shape
    out_ref[...] += jnp.sum(contrib.reshape(tb // 8, 8, cp), axis=0)


def nc1_loss_v9_cosine(x, labels, means, occurrence, *, tb=512):
    """Returns (loss, means), matching the PyTorch module's forward."""
    B, D = x.shape
    C, _ = means.shape

    # Lane-dense class dimension.
    C_pad = _round_up(C, 128)

    # Batch tile: big (amortize per-step overhead), multiple of 8, covers B / ncores.
    per_core = (B + _NCORES - 1) // _NCORES
    tb = min(_round_up(tb, 8), _round_up(per_core, 8))
    B_pad = _round_up(B, tb * _NCORES)
    steps = B_pad // (tb * _NCORES)

    xp = x
    labels = labels.astype(jnp.int32)
    if B_pad != B:
        xp = jnp.pad(x, ((0, B_pad - B), (0, 0)))
        labels = jnp.pad(labels, (0, B_pad - B), constant_values=-1)
    labels2d = labels.reshape(B_pad, 1)

    # Grid-invariant: normalize means once, transpose to (D, C), pad class dim.
    means_f32 = means.astype(jnp.float32)
    m_norm = jnp.sqrt(jnp.sum(means_f32 * means_f32, axis=1, keepdims=True)) + 1e-10
    m_n_t = (means_f32 / m_norm).T                                   # (D, C)
    if C_pad != C:
        m_n_t = jnp.pad(m_n_t, ((0, 0), (0, C_pad - C)))

    partials = pl.pallas_call(
        _nc1_kernel,
        out_shape=jax.ShapeDtypeStruct((_NCORES * 8, C_pad), jnp.float32),
        grid_spec=pltpu.PrefetchScalarGridSpec(
            num_scalar_prefetch=0,
            grid=(_NCORES, steps),
            in_specs=[
                pl.BlockSpec((tb, D), lambda c, i: (c * steps + i, 0)),   # x batch tile
                pl.BlockSpec((tb, 1), lambda c, i: (c * steps + i, 0)),   # labels batch tile
                pl.BlockSpec((D, C_pad), lambda c, i: (0, 0)),            # normalized means^T (resident)
            ],
            out_specs=pl.BlockSpec((8, C_pad), lambda c, i: (c, 0)),      # per-core partial class sums
        ),
        compiler_params=pltpu.CompilerParams(
            dimension_semantics=("parallel", "arbitrary"),
        ),
    )(xp, labels2d, m_n_t)

    # Cheap O(C) finalize outside the kernel: combine per-core partials, gate by
    # occurrence, log2-normalize, clip, mean over the (unpadded) classes.
    acc = jnp.sum(partials, axis=0)[:C]
    occ = occurrence.astype(jnp.float32)
    mask2 = (occ > 0).astype(jnp.float32)
    n_log = jnp.log2(occ + 1.0) + 1e-10
    loss = jnp.sum(jnp.clip(acc * mask2 / n_log, 1e-12, 1e12)) / C
    return loss, means


def _reference(x, labels, means, occurrence):
    x_n = x / (jnp.linalg.norm(x, axis=1, keepdims=True) + 1e-10)
    m_n = means / (jnp.linalg.norm(means, axis=1, keepdims=True) + 1e-10)
    distmat = 1.0 - x_n @ m_n.T
    B, C = distmat.shape
    mask = (labels[:, None] == jnp.arange(C)[None, :]).astype(jnp.float32)
    mask2 = (occurrence[None, :] > 0).astype(jnp.float32)
    D = jnp.sum(distmat * mask * mask2, axis=0)
    N = jnp.log2(occurrence.astype(jnp.float32) + 1.0) + 1e-10
    return jnp.sum(jnp.clip(D / N, 1e-12, 1e12)) / C


if __name__ == "__main__":
    num_classes = 8
    feat_dim = 32
    batch = 16

    key = jax.random.PRNGKey(0)
    kx, km, kl = jax.random.split(key, 3)

    x = jax.random.normal(kx, (batch, feat_dim), dtype=jnp.float32)
    labels = jax.random.randint(kl, (batch,), 0, num_classes, dtype=jnp.int32)
    # Deterministic parameter init (nn.Parameter(torch.randn(C, D)) analogue)
    means = jax.random.normal(km, (num_classes, feat_dim), dtype=jnp.float32)
    # Deterministic per-class occurrence counts (one zero to exercise mask2)
    occurrence = jnp.array([50, 30, 0, 12, 7, 100, 3, 25], dtype=jnp.float32)

    loss, means_out = nc1_loss_v9_cosine(x, labels, means, occurrence)
    loss = jax.block_until_ready(loss)

    ref = _reference(x, labels, means, occurrence)
    assert jnp.allclose(loss, ref, rtol=1e-5, atol=1e-5), (loss, ref)

    print("KERNEL_OK")
</pallas_src>

<mosaic_0001>
module attributes {stable_mosaic.version = 11 : i64} {
  func.func @_nc1_kernel(%arg0: i32, %arg1: i32, %arg2: memref<8x32xf32, #tpu.memory_space<vmem>>, %arg3: memref<8x1xi32, #tpu.memory_space<vmem>>, %arg4: memref<32x128xf32, #tpu.memory_space<vmem>>, %arg5: memref<8x128xf32, #tpu.memory_space<vmem>>) attributes {dimension_semantics = [#tpu.dimension_semantics<parallel>, #tpu.dimension_semantics<arbitrary>], iteration_bounds = array<i64: 2, 1>, scalar_prefetch = 0 : i64, scratch_operands = 0 : i64, tpu.core_type = #tpu.core_type<tc>, window_params = [{transform_indices = @transform_0, window_bounds = array<i64: 8, 32>}, {transform_indices = @transform_1, window_bounds = array<i64: 8, 1>}, {pipeline_mode = #tpu.pipeline_mode<synchronous>, transform_indices = @transform_2, window_bounds = array<i64: 32, 128>}, {transform_indices = @transform_3, window_bounds = array<i64: 8, 128>}]} {
    %c0_i32 = arith.constant 0 : i32
    %0 = arith.cmpi eq, %arg1, %c0_i32 : i32
    %1 = arith.extui %0 : i1 to i32
    %c0_i32_0 = arith.constant 0 : i32
    %2 = arith.cmpi ne, %1, %c0_i32_0 : i32
    scf.if %2 {
      %cst_15 = arith.constant 0.000000e+00 : f32
      %28 = vector.broadcast %cst_15 : f32 to vector<8x128xf32>
      %c0_16 = arith.constant 0 : index
      %c0_17 = arith.constant 0 : index
      %29 = vector.load %arg5[%c0_16, %c0_17] : memref<8x128xf32, #tpu.memory_space<vmem>>, vector<8x128xf32>
      tpu.vector_store %arg5[%c0_16, %c0_17], %28 {strides = array<i32>} : memref<8x128xf32, #tpu.memory_space<vmem>>, vector<8x128xf32>,
    } else {
    }
    %c0 = arith.constant 0 : index
    %c0_1 = arith.constant 0 : index
    %3 = vector.load %arg2[%c0, %c0_1] : memref<8x32xf32, #tpu.memory_space<vmem>>, vector<8x32xf32>
    %c0_2 = arith.constant 0 : index
    %c0_3 = arith.constant 0 : index
    %4 = vector.load %arg3[%c0_2, %c0_3] : memref<8x1xi32, #tpu.memory_space<vmem>>, vector<8x1xi32>
    %5 = arith.mulf %3, %3 : vector<8x32xf32>
    %cst = arith.constant dense<0.000000e+00> : vector<8xf32>
    %6 = vector.multi_reduction <add>, %5, %cst [1] : vector<8x32xf32> to vector<8xf32>
    %7 = vector.shape_cast %6 : vector<8xf32> to vector<8x1xf32>
    %8 = math.sqrt %7 : vector<8x1xf32>
    %cst_4 = arith.constant 1.000000e-10 : f32
    %9 = vector.broadcast %cst_4 : f32 to vector<8x1xf32>
    %10 = arith.addf %8, %9 : vector<8x1xf32>
    %11 = tpu.reciprocal %10 : vector<8x1xf32> -> vector<8x1xf32>
    %12 = vector.broadcast %11 : vector<8x1xf32> to vector<8x32xf32>
    %13 = arith.mulf %3, %12 : vector<8x32xf32>
    %c0_5 = arith.constant 0 : index
    %c0_6 = arith.constant 0 : index
    %14 = vector.load %arg4[%c0_5, %c0_6] : memref<32x128xf32, #tpu.memory_space<vmem>>, vector<32x128xf32>
    %cst_7 = arith.constant dense<0.000000e+00> : vector<8x128xf32>
    %15 = tpu.matmul %13, %14, %cst_7 {dimension_numbers = #tpu.dot_dimension_numbers<[1], [0], [0], [1], [0, 0, 1, 1], [], []>} : vector<8x32xf32>, vector<32x128xf32>, vector<8x128xf32> -> vector<8x128xf32>
    %16 = tpu.iota {dimensions = array<i32: 1>} : vector<8x128xi32>
    %17 = vector.broadcast %4 : vector<8x1xi32> to vector<8x128xi32>
    %18 = arith.cmpi eq, %17, %16 : vector<8x128xi32>
    %cst_8 = arith.constant 1.000000e+00 : f32
    %19 = vector.broadcast %cst_8 : f32 to vector<8x128xf32>
    %20 = arith.subf %19, %15 : vector<8x128xf32>
    %cst_9 = arith.constant 0.000000e+00 : f32
    %21 = vector.broadcast %cst_9 : f32 to vector<8x128xf32>
    %22 = arith.select %18, %20, %21 : vector<8x128xi1>, vector<8x128xf32>
    %c0_10 = arith.constant 0 : index
    %c0_11 = arith.constant 0 : index
    %23 = vector.load %arg5[%c0_10, %c0_11] : memref<8x128xf32, #tpu.memory_space<vmem>>, vector<8x128xf32>
    %24 = vector.shape_cast %22 : vector<8x128xf32> to vector<1x8x128xf32>
    %cst_12 = arith.constant dense<0.000000e+00> : vector<8x128xf32>
    %25 = vector.multi_reduction <add>, %24, %cst_12 [0] : vector<1x8x128xf32> to vector<8x128xf32>
    %26 = arith.addf %23, %25 : vector<8x128xf32>
    %c0_13 = arith.constant 0 : index
    %c0_14 = arith.constant 0 : index
    %27 = vector.load %arg5[%c0_13, %c0_14] : memref<8x128xf32, #tpu.memory_space<vmem>>, vector<8x128xf32>
    tpu.vector_store %arg5[%c0_13, %c0_14], %26 {strides = array<i32>} : memref<8x128xf32, #tpu.memory_space<vmem>>, vector<8x128xf32>,
    return
  }
  func.func @transform_0(%arg0: i32, %arg1: i32) -> (i32, i32) {
    %c1_i32 = arith.constant 1 : i32
    %0 = arith.muli %arg0, %c1_i32 : i32
    %1 = arith.addi %0, %arg1 : i32
    %c0_i32 = arith.constant 0 : i32
    %c0_i32_0 = arith.constant 0 : i32
    return %1, %c0_i32 : i32, i32
  }
  func.func @transform_1(%arg0: i32, %arg1: i32) -> (i32, i32) {
    %c1_i32 = arith.constant 1 : i32
    %0 = arith.muli %arg0, %c1_i32 : i32
    %1 = arith.addi %0, %arg1 : i32
    %c0_i32 = arith.constant 0 : i32
    %c0_i32_0 = arith.constant 0 : i32
    return %1, %c0_i32 : i32, i32
  }
  func.func @transform_2(%arg0: i32, %arg1: i32) -> (i32, i32) {
    %c0_i32 = arith.constant 0 : i32
    %c0_i32_0 = arith.constant 0 : i32
    %c0_i32_1 = arith.constant 0 : i32
    return %c0_i32, %c0_i32_0 : i32, i32
  }
  func.func @transform_3(%arg0: i32, %arg1: i32) -> (i32, i32) {
    %c0_i32 = arith.constant 0 : i32
    %c0_i32_0 = arith.constant 0 : i32
    return %arg0, %c0_i32 : i32, i32
  }
}

</mosaic_0001>

<llo_original>
// kernel: tpu_custom_call.1
$region0: #{tpu_custom_call.1}
  #allocation0 [shape = 'u32[]', space=smem, size = 0x4, offset = 0x4, fixed_abs, tag = 'smem constant byte address 0x4 - core index']
  #allocation1 [shape = 'u32[72,128]{1,0:T(1,128)}', space=vmem, size = 0x9000, scoped, tag = 'internal scratch']
  %s0 = inlined_call_operand.vmem [shape: f32[16,32], index: 0, kind: input, shape index: {}]
  %s1 = inlined_call_operand.vmem [shape: s32[16,1], index: 1, kind: input, shape index: {}]
  %s2 = inlined_call_operand.hbm [shape: f32[32,128], index: 2, kind: input, shape index: {}]
  %s3 = inlined_call_operand.hbm [shape: f32[16,128], index: 3, kind: output, shape index: {}]
  %s4 = sld [smem:[#allocation0]]
  $region53: #{tpu_custom_call.1} parent=0
    _
  %s6 = ssub.s32 1, %s4
  %s7 = scalar_select 0, %s6, %s4
  $region1: #{tpu_custom_call.1} parent=0
    #allocation2 [shape = 'u8[16384]{0}', space=vmem, size = 0x4000, scoped, tag = 'input window, operand 2, single buffered']
    #allocation3 [shape = 's32[2]{0}', space=sflag, size = 0x8, scoped, tag = 'scoped memory for tpu_custom_call.1']
    #allocation4 [shape = 's32[2]{0}', space=sflag, size = 0x8, scoped, tag = 'scoped memory for tpu_custom_call.1']
    #allocation5 [shape = 'u8[8192]{0}', space=vmem, size = 0x2000, scoped, tag = 'output window, operand 0']
    %8 = vsyncpa [#allocation3], 0
    %9 = vsyncpa [#allocation4], 0
    %s10 = scalar_lea.sflag [#allocation4], 1
    %11 = vsyncpa %s10, 0
    loop: start=0, step=1, limit=4
    $region2: #{tpu_custom_call.1} parent=1 // loop_pre_header
      _
    $region3: #{tpu_custom_call.1} parent=1 // loop_header
      %s13 = sphi 0, %s17
      %p14 = scmp.ge.s32.totalorder %s13, 4
      %s20 = sphi 0, %s32
      %s21 = sphi 0, %s28
      %s22 = sphi 0, %s20
      %s23 = sphi 0, %s21
      %s24 = sphi 0, %s22
      %s25 = sphi 0, %s23
      %s37 = sphi 0, %s39
      %s40 = sphi 0, %s37
      %s41 = sphi 0, %s40
      %s57 = sphi 0, %s41
      %s65 = sphi 0, %s67
      %s68 = sphi 0, %s65
      %s69 = sphi 0, %s68
      %s85 = sphi 0, %s69
      %s89 = sphi 0, %s89
      %s91 = sphi 0, %s89
      %s92 = sphi 0, %s91
      %s106 = sphi 0, %s92
      %s112 = sphi 0, %s114
      %s115 = sphi 0, %s112
      %s116 = sphi 0, %s115
      %s132 = sphi 0, %s116
    $region4: #{tpu_custom_call.1} parent=1 // loop_header_branch
      %16 = sbr.rel (%p14) target = $region8
    $region5: #{tpu_custom_call.1} parent=1 // loop_body
      %s18 = ssub.s32 %s13, 1
      %s19 = ssub.s32 %s13, 2
      %s26 = sadd.s32 1, %s21
      %p27 = scmp.ge.s32.totalorder %s26, 1
      %s28 = scalar_select %p27, 0, %s26
      %s29 = sadd.s32 1, %s20
      %s30 = scalar_select %p27, %s29, %s20
      %p31 = scmp.ge.s32.totalorder %s30, 2
      %s32 = scalar_select %p31, 0, %s30
      %s33 = sadd.s32 %s20, %s21
      %s34 = sadd.s32 %s32, %s28
      %s35 = ssub.s32 %s33, %s34
      %p36 = scmp.eq.s32.totalorder %s35, 0
      %s38 = sadd.s32 %s37, 1
      %s39 = scalar_select %p36, %s37, %s38
      %p42 = pneg %p36
      %p43 = scmp.eq.s32.totalorder %s13, 1
      %p44 = por %p42, %p43
      %p45 = scmp.ne.s32.totalorder %s37, %s40
      %p46 = scmp.eq.s32.totalorder %s13, 0
      %p47 = por %p45, %p46
      %p48 = scmp.ne.s32.totalorder %s37, %s40
      %p49 = scmp.eq.s32.totalorder %s18, 1
      %p50 = por %p48, %p49
      %p51 = scmp.ne.s32.totalorder %s40, %s41
      %p52 = scmp.eq.s32.totalorder %s18, 0
      %p53 = por %p51, %p52
      %p54 = scmp.ne.s32.totalorder %s40, %s41
      %p55 = scmp.eq.s32.totalorder %s19, 1
      %p56 = por %p54, %p55
      %p58 = scmp.ne.s32.totalorder %s41, %s57
      %p59 = scmp.eq.s32.totalorder %s19, 0
      %p60 = por %p58, %p59
      %s61 = sadd.s32 %s20, %s21
      %s62 = sadd.s32 %s32, %s28
      %s63 = ssub.s32 %s61, %s62
      %p64 = scmp.eq.s32.totalorder %s63, 0
      %s66 = sadd.s32 %s65, 1
      %s67 = scalar_select %p64, %s65, %s66
      %p70 = pneg %p64
      %p71 = scmp.eq.s32.totalorder %s13, 1
      %p72 = por %p70, %p71
      %p73 = scmp.ne.s32.totalorder %s65, %s68
      %p74 = scmp.eq.s32.totalorder %s13, 0
      %p75 = por %p73, %p74
      %p76 = scmp.ne.s32.totalorder %s65, %s68
      %p77 = scmp.eq.s32.totalorder %s18, 1
      %p78 = por %p76, %p77
      %p79 = scmp.ne.s32.totalorder %s68, %s69
      %p80 = scmp.eq.s32.totalorder %s18, 0
      %p81 = por %p79, %p80
      %p82 = scmp.ne.s32.totalorder %s68, %s69
      %p83 = scmp.eq.s32.totalorder %s19, 1
      %p84 = por %p82, %p83
      %p86 = scmp.ne.s32.totalorder %s69, %s85
      %p87 = scmp.eq.s32.totalorder %s19, 0
      %p88 = por %p86, %p87
      %s90 = sadd.s32 %s89, 1
      %p93 = scmp.eq.s32.totalorder %s13, 1
      %p94 = scmp.ne.s32.totalorder %s89, %s91
      %p95 = scmp.eq.s32.totalorder %s13, 0
      %p96 = por %p94, %p95
      %p97 = scmp.ne.s32.totalorder %s89, %s91
      %p98 = scmp.eq.s32.totalorder %s18, 1
      %p99 = por %p97, %p98
      %p100 = scmp.ne.s32.totalorder %s91, %s92
      %p101 = scmp.eq.s32.totalorder %s18, 0
      %p102 = por %p100, %p101
      %p103 = scmp.ne.s32.totalorder %s91, %s92
      %p104 = scmp.eq.s32.totalorder %s19, 1
      %p105 = por %p103, %p104
      %p107 = scmp.ne.s32.totalorder %s92, %s106
      %p108 = scmp.eq.s32.totalorder %s19, 0
      %p109 = por %p107, %p108
      %s110 = ssub.s32 %s20, %s32
      %p111 = scmp.eq.s32.totalorder %s110, 0
      %s113 = sadd.s32 %s112, 1
      %s114 = scalar_select %p111, %s112, %s113
      %p117 = pneg %p111
      %p118 = scmp.eq.s32.totalorder %s13, 1
      %p119 = por %p117, %p118
      %p120 = scmp.ne.s32.totalorder %s112, %s115
      %p121 = scmp.eq.s32.totalorder %s13, 0
      %p122 = por %p120, %p121
      %p123 = scmp.ne.s32.totalorder %s112, %s115
      %p124 = scmp.eq.s32.totalorder %s18, 1
      %p125 = por %p123, %p124
      %p126 = scmp.ne.s32.totalorder %s115, %s116
      %p127 = scmp.eq.s32.totalorder %s18, 0
      %p128 = por %p126, %p127
      %p129 = scmp.ne.s32.totalorder %s115, %s116
      %p130 = scmp.eq.s32.totalorder %s19, 1
      %p131 = por %p129, %p130
      %p133 = scmp.ne.s32.totalorder %s116, %s132
      %p134 = scmp.eq.s32.totalorder %s19, 0
      %p135 = por %p133, %p134
      %p136 = scmp.le.s32.totalorder 1, %s13
      %p137 = scmp.lt.s32.totalorder %s13, 3
      %p138 = pnand %p136, %p137
      %p139 = pneg %p138
      // Predicated region
      $region9: #{tpu_custom_call.1} parent=5 // pred_check
        _
      $region10: #{tpu_custom_call.1} parent=5 // pred_check_branch
        %141 = sbr.rel (%p138) target = $region12
      $region11: #{tpu_custom_call.1} parent=5 // pred_region
        %s142 = ssub.s32 %s13, 1
        // Predicated region
        $region13: #{tpu_custom_call.1} parent=11 // pred_check
          %p143 = pneg %p102
        $region14: #{tpu_custom_call.1} parent=11 // pred_check_branch
          %145 = sbr.rel (%p143) target = $region16
        $region15: #{tpu_custom_call.1} parent=11 // pred_region
          %147 = vsyncadd [#allocation3], 0
          %s148 = sshll.u32 %s2, 4
          %s149 = int_to_ptr.hbm [resolvable:$true] %s148
          %s150 = sshll.u32 [#allocation2], 4
          %s151 = int_to_ptr.vmem [resolvable:$true] %s150
          %156 = dma.hbm_to_vmem [thread:$0]  %s149, 512, %s151, [#allocation3], 128, 128, 8
        $region16: #{tpu_custom_call.1} parent=11 // pred_fallthru
          _
      $region12: #{tpu_custom_call.1} parent=5 // pred_fallthru
        _
      %p157 = scmp.lt.s32.totalorder %s13, 2
      // Predicated region
      $region17: #{tpu_custom_call.1} parent=5 // pred_check
        %p158 = pneg %p157
      $region18: #{tpu_custom_call.1} parent=5 // pred_check_branch
        %160 = sbr.rel (%p158) target = $region20
      $region19: #{tpu_custom_call.1} parent=5 // pred_region
        // Predicated region
        $region21: #{tpu_custom_call.1} parent=19 // pred_check
          %p161 = pneg %p47
        $region22: #{tpu_custom_call.1} parent=19 // pred_check_branch
          %163 = sbr.rel (%p161) target = $region24
        $region23: #{tpu_custom_call.1} parent=19 // pred_region
          %s164 = sadd.s32 %s20, %s21
          %p165 = scmp.lt.s32.totalorder %s164, 1
          %s166 = scalar_select %p165, %s164, 1
          %s167 = smul.addr %s166, 8
          %s168 = scalar_lea.vmem %s0, %s167
          %s169 = sadd.s32 %s20, %s21
        $region24: #{tpu_custom_call.1} parent=19 // pred_fallthru
          _
        // Predicated region
        $region25: #{tpu_custom_call.1} parent=19 // pred_check
          %p170 = pneg %p75
        $region26: #{tpu_custom_call.1} parent=19 // pred_check_branch
          %172 = sbr.rel (%p170) target = $region28
        $region27: #{tpu_custom_call.1} parent=19 // pred_region
          %s173 = sadd.s32 %s20, %s21
          %p174 = scmp.lt.s32.totalorder %s173, 1
          %s175 = scalar_select %p174, %s173, 1
          %s176 = smul.addr %s175, 8
          %s177 = scalar_lea.vmem %s1, %s176
          %s178 = sadd.s32 %s20, %s21
        $region28: #{tpu_custom_call.1} parent=19 // pred_fallthru
          _
      $region20: #{tpu_custom_call.1} parent=5 // pred_fallthru
        _
      %p179 = scmp.le.s32.totalorder 1, %s13
      %p180 = scmp.lt.s32.totalorder %s13, 3
      %p181 = pnand %p179, %p180
      %p182 = pneg %p181
      // Predicated region
      $region29: #{tpu_custom_call.1} parent=5 // pred_check
        _
      $region30: #{tpu_custom_call.1} parent=5 // pred_check_branch
        %184 = sbr.rel (%p181) target = $region32
      $region31: #{tpu_custom_call.1} parent=5 // pred_region
        %s185 = ssub.s32 %s13, 1
        // Predicated region
        $region33: #{tpu_custom_call.1} parent=31 // pred_check
          %p186 = pneg %p102
        $region34: #{tpu_custom_call.1} parent=31 // pred_check_branch
          %188 = sbr.rel (%p186) target = $region36
        $region35: #{tpu_custom_call.1} parent=31 // pred_region
          %190 = dma.done [#allocation3], 512
        $region36: #{tpu_custom_call.1} parent=31 // pred_fallthru
          _
        %s191 = sadd.s32 %s22, %s23
        %p192 = scmp.lt.s32.totalorder %s191, 1
        %s193 = scalar_select %p192, %s191, 1
        %s194 = smul.addr %s193, 8
        %s195 = scalar_lea.vmem %s0, %s194
        %p196 = pneg %p53
        %p197 = pneg %p50
        %s198 = sadd.s32 %s22, %s23
        %p199 = scmp.lt.s32.totalorder %s198, 1
        %s200 = scalar_select %p199, %s198, 1
        %s201 = smul.addr %s200, 8
        %s202 = scalar_lea.vmem %s1, %s201
        %p203 = pneg %p81
        %p204 = pneg %p78
        %p205 = pneg %p102
        %p206 = pneg %p99
        %p207 = pneg %p128
        %p208 = pneg %p125
        %s209 = sand.u32 %s115, 1
        %s210 = scalar_lea.sflag [#allocation4], %s209
        %s211 = sand.u32 %s115, 1
        %s212 = smul.addr %s211, 8
        %s213 = scalar_lea.vmem [#allocation5], %s212
        %s214 = sadd.s32 %s22, %s23
        %p215 = scmp.lt.s32.totalorder %s214, 1
        %s216 = scalar_select %p215, %s214, 1
        %s217 = smul.addr %s216, 8
        %s218 = scalar_lea.vmem %s0, %s217
        %s219 = sadd.s32 %s22, %s23
        %s220 = sadd.s32 %s22, %s23
        %p221 = scmp.lt.s32.totalorder %s220, 1
        %s222 = scalar_select %p221, %s220, 1
        %s223 = smul.addr %s222, 8
        %s224 = scalar_lea.vmem %s1, %s223
        %s225 = sadd.s32 %s22, %s23
        %p226 = scmp.eq.s32.totalorder %s23, 0
        // Predicated region
        $region37: #{tpu_custom_call.1} parent=31 // pred_check
          %p227 = pneg %p226
        $region38: #{tpu_custom_call.1} parent=31 // pred_check_branch
          %229 = sbr.rel (%p227) target = $region40
        $region39: #{tpu_custom_call.1} parent=31 // pred_region
          %230 = vst [vmem:[%s213] sm:$0xff] 0.0
        $region40: #{tpu_custom_call.1} parent=31 // pred_fallthru
          _
        %v231 = vld [vmem:[%s218] sm:$0xff]
        %v232 = vld [vmem:[%s224] sm:$0xff]
        %v233 = vmul.f32 %v231, %v231
        %vm234 = vcmask 261120
        %v235 = vsel %vm234, %v233, 0.0
        %236 = vadd.xlane.f32.xlu0 %v235
        %v237 = vpop.xlane.xlu0 %236
        %v238 = vrsqrt.pop %v237
        %v239 = vmul.f32 %v238, %v237
        %v240 = vmul.f32 %v239, %v238
        %v241 = vmul.f32 0.5, %v240
        %v242 = vsub.f32 1.5, %v241
        %v243 = vmul.f32 %v238, %v242
        %v244 = vmul.f32 %v237, %v243
        %vm245 = vcmp.eq.f32.partialorder %v237, inf
        %v246 = vsel %vm245, %v237, %v244
        %vm247 = vcmp.eq.f32.partialorder %v237, 0.0
        %v248 = vand.u32 %v237, 2147483648
        %v249 = vsel %vm247, %v248, %v246
        %v250 = vadd.f32 %v249, 1e-10
        %v251 = vrcp.pop %v250
        %v252 = vmul.f32 %v250, %v251
        %v253 = vsub.f32 1.0, %v252
        %v254 = vmul.f32 %v251, %v253
        %v255 = vadd.f32 %v251, %v254
        %vm256 = vweird.f32 %v250
        %vm257 = vweird.f32 %v251
        %vm258 = vmor %vm256, %vm257
        %v259 = vsel %vm258, %v251, %v255
        %v260 = vand.u32 2147483647, %v250
        %vm261 = vcmp.eq.f32.partialorder %v260, 8.507059e+37
        %v262 = vand.u32 %v250, 2147483648
        %v263 = vor.u32 1.1754944e-38, %v262
        %v264 = vsel %vm261, %v263, %v259
        %v265 = vmul.f32 %v231, %v264
        %v266 = vld [vmem:[#allocation2] sm:$0xff]
        %v267 = vld [vmem:[#allocation2 + $0x8] sm:$0xff]
        %v268 = vld [vmem:[#allocation2 + $0x10] sm:$0xff]
        %v269 = vld [vmem:[#allocation2 + $0x18] sm:$0xff]
        %v271 = vsel %vm234, %v265, 0
        %273 = vmatpush.msra.mxu0 0.0
        %274 = vmatpush.msra.mxu0 0.0
        %275 = vmatpush.msra.mxu0 0.0
        %276 = vmatpush.msra.mxu0 0.0
        %277 = vmatpush.msra.mxu0 0.0
        %278 = vmatpush.msra.mxu0 0.0
        %279 = vmatpush.msra.mxu0 0.0
        %280 = vmatpush.msra.mxu0 0.0
        %281 = vmatpush.msra.mxu0 0.0
        %282 = vmatpush.msra.mxu0 0.0
        %283 = vmatpush.msra.mxu0 0.0
        %284 = vmatpush.msra.mxu0 0.0
        %285 = vmatpush.msra.mxu0 %v269
        %286 = vmatpush.msra.mxu0 %v268
        %287 = vmatpush.msra.mxu0 %v267
        %288 = vmatpush.msra.mxu0 %v266
        %289 = vmatmul.f32.gmra.mxu0 %v271
        %v290 = vpop.f32.mrf.mxu0
        %v291 = vadd.f32 0.0, %v290
        %292 = vdwg.mxu0
        %v293 = vlaneseq
        %v294 = vand.u32 %v293, 127
        %295 = vset.pattern.permute.xlu0 0
        %296 = vperm.xlu0 %295, %v232
        %v297 = vpop.permute.xlu0 %296
        %vm298 = vcmp.eq.s32.totalorder %v297, %v294
        %v299 = vsub.f32 1.0, %v291
        %v300 = vsel %vm298, %v299, 0.0
        %v301 = vld [vmem:[%s213] sm:$0xff]
        %v302 = vadd.f32 %v300, 0.0
        %v303 = vadd.f32 %v301, %v302
        %304 = vst [vmem:[%s213] sm:$0xff] %v303
        %s305 = sand.u32 %s115, 1
        %s306 = scalar_lea.sflag [#allocation4], %s305
        %s307 = sand.u32 %s115, 1
        %s308 = smul.addr %s307, 8
        %s309 = scalar_lea.vmem [#allocation5], %s308
        // Predicated region
        $region41: #{tpu_custom_call.1} parent=31 // pred_check
          %p310 = pneg %p125
        $region42: #{tpu_custom_call.1} parent=31 // pred_check_branch
          %312 = sbr.rel (%p310) target = $region44
        $region43: #{tpu_custom_call.1} parent=31 // pred_region
          %314 = vsyncadd %s306, 0
          %s315 = smul.addr %s22, 8
          %s316 = scalar_lea.hbm %s3, %s315
          %s318 = sshll.u32 %s309, 4
          %s319 = int_to_ptr.vmem [resolvable:$true] %s318
          %s320 = sshll.u32 %s316, 4
          %s321 = int_to_ptr.hbm [resolvable:$true] %s320
          %323 = dma.vmem_to_hbm [thread:$0]  %s319, 128, %s321, %s306
        $region44: #{tpu_custom_call.1} parent=31 // pred_fallthru
          _
      $region32: #{tpu_custom_call.1} parent=5 // pred_fallthru
        _
      %p324 = scmp.le.s32.totalorder 2, %s13
      // Predicated region
      $region45: #{tpu_custom_call.1} parent=5 // pred_check
        %p325 = pneg %p324
      $region46: #{tpu_custom_call.1} parent=5 // pred_check_branch
        %327 = sbr.rel (%p325) target = $region48
      $region47: #{tpu_custom_call.1} parent=5 // pred_region
        %s328 = ssub.s32 %s13, 2
        // Predicated region
        $region49: #{tpu_custom_call.1} parent=47 // pred_check
          %p329 = pneg %p131
        $region50: #{tpu_custom_call.1} parent=47 // pred_check_branch
          %331 = sbr.rel (%p329) target = $region52
        $region51: #{tpu_custom_call.1} parent=47 // pred_region
          %s332 = sand.u32 %s116, 1
          %s333 = scalar_lea.sflag [#allocation4], %s332
          %s334 = sand.u32 %s116, 1
          %s335 = smul.addr %s334, 8
          %s336 = scalar_lea.vmem [#allocation5], %s335
          %338 = dma.done %s333, 128
        $region52: #{tpu_custom_call.1} parent=47 // pred_fallthru
          _
      $region48: #{tpu_custom_call.1} parent=5 // pred_fallthru
        _
    $region6: #{tpu_custom_call.1} parent=1 // loop_footer
      %s17 = sadd.s32 1, %s13
    $region7: #{tpu_custom_call.1} parent=1 // loop_footer_branch
      %12 = sbr.rel target = $region3
    $region8: #{tpu_custom_call.1} parent=1 // loop_exit
      _
    %339 = vsyncpa [#allocation3], 1
    %s340 = scalar_lea.sflag [#allocation3], 1
    %341 = vsyncpa %s340, 1
    %342 = vsyncpa [#allocation4], 1
    %s343 = scalar_lea.sflag [#allocation4], 1
    %344 = vsyncpa %s343, 1

</llo_original>
